<compile_context>
chip_gen: v7x
topology: tpu7x:2x2x1
jax: 0.10.0
libtpu: 0.0.40
codegen_flags: <defaults>
</compile_context>

<pallas_src>
import jax
import jax.numpy as jnp
from jax import lax
from jax.experimental import pallas as pl
from jax.experimental.pallas import tpu as pltpu


def _round_up(a, m):
    return (a + m - 1) // m * m


def _choose_bm(B):
    """Batch tile size: multiple of 128 (lane-dense), even step count when possible."""
    target = 1024                                  # sweet spot once output is lane-dense
    if B <= 256:
        return _round_up(B, 128)                   # single step for tiny batches
    if B <= 2 * target:
        return _round_up(pl.cdiv(B, 2), 128)       # 2 steps -> one per v7x TensorCore
    steps = _round_up(pl.cdiv(B, target), 2)       # even, >= 4 steps
    return min(2048, _round_up(pl.cdiv(B, steps), 128))


def value_decoder_kernel(x_ref, w1t_ref, b1_ref, w2_ref, b2_ref, w3_ref, b3_ref,
                         o_ref):
    # In-kernel f32 -> bf16 cast of the activation tile (VPU pack, hides under MXU).
    xb = x_ref[...].astype(jnp.bfloat16)                                # (bm, E)

    # Layer 1: x @ W1^T  (MXU, f32 accumulation) + bias row, ReLU.
    h1 = jnp.dot(xb, w1t_ref[...], preferred_element_type=jnp.float32)  # (bm, H)
    h1 = jnp.maximum(h1 + b1_ref[...], 0.0)

    # Layer 2 computed transposed: h2^T = W2 @ h1^T -> (H, bm).
    # Contract the minor dims of both operands (A.B^T, attention-score style):
    # MXU sees M=H, K=H, N=bm, so N fills the 256-wide MXU and the batch ends
    # up on the lane axis for a lane-dense store.
    h2t = lax.dot_general(w2_ref[...], h1.astype(jnp.bfloat16),
                          dimension_numbers=(((1,), (1,)), ((), ())),
                          preferred_element_type=jnp.float32)            # (H, bm)
    h2t = jnp.maximum(h2t + b2_ref[...], 0.0)

    # Output layer Linear(H, 1): VPU multiply + sublane (XLU) reduce; scalar
    # bias from SMEM.  Result is a (1, bm) lane-dense row.
    v = jnp.sum(h2t * w3_ref[...], axis=0, keepdims=True) + b3_ref[0]
    o_ref[...] = v.astype(o_ref.dtype)


def prepare_value_decoder_params(w1, b1, w2, b2, w3, b3):
    """One-time weight prep (hoisted out of the per-call path).

    PyTorch layouts in: w1 (H, E), w2 (H, H), w3 (1, H); biases (H,), (H,), (1,).
    """
    H, E = w1.shape
    return {
        "w1t": w1.T.astype(jnp.bfloat16),              # (E, H) for layer-1 x @ W1^T
        "b1":  b1.reshape(1, H).astype(jnp.float32),   # row (broadcast over sublanes)
        "w2":  w2.astype(jnp.bfloat16),                # (H, H) native (out,in) layout
        "b2":  b2.reshape(H, 1).astype(jnp.float32),   # column (broadcast over lanes)
        "w3":  w3.reshape(H, 1).astype(jnp.float32),   # column; head stays f32 (VPU)
        "b3":  b3.reshape(1).astype(jnp.float32),      # scalar -> SMEM
    }


def value_decoder(x, params, *, bm=None):
    """x: (B, E) float32.  params: output of prepare_value_decoder_params."""
    B, E = x.shape
    H = params["w2"].shape[0]
    bm = _choose_bm(B) if bm is None else max(128, _round_up(bm, 128))
    grid = (pl.cdiv(B, bm),)

    out = pl.pallas_call(
        value_decoder_kernel,
        out_shape=jax.ShapeDtypeStruct((1, B), jnp.float32),
        grid_spec=pltpu.PrefetchScalarGridSpec(
            num_scalar_prefetch=0,
            grid=grid,
            in_specs=[
                pl.BlockSpec((bm, E), lambda i: (i, 0)),   # x tile (f32, cast in-kernel)
                pl.BlockSpec((E, H), lambda i: (0, 0)),    # W1^T resident (bf16)
                pl.BlockSpec((1, H), lambda i: (0, 0)),    # b1 row
                pl.BlockSpec((H, H), lambda i: (0, 0)),    # W2 resident (bf16)
                pl.BlockSpec((H, 1), lambda i: (0, 0)),    # b2 column
                pl.BlockSpec((H, 1), lambda i: (0, 0)),    # w3 column (f32)
                pl.BlockSpec(memory_space=pltpu.MemorySpace.SMEM),  # b3 scalar
            ],
            out_specs=pl.BlockSpec((1, bm), lambda i: (0, i)),  # lane-dense row
        ),
        compiler_params=pltpu.CompilerParams(
            dimension_semantics=("parallel",)),
    )(x, params["w1t"], params["b1"], params["w2"], params["b2"],
      params["w3"], params["b3"])
    return out.reshape(B, 1)


def _torch_linear_init(key, out_features, in_features):
    """Deterministic init mimicking nn.Linear default: U(-1/sqrt(in), 1/sqrt(in))."""
    kw, kb = jax.random.split(key)
    bound = 1.0 / jnp.sqrt(jnp.float32(in_features))
    w = jax.random.uniform(kw, (out_features, in_features), jnp.float32,
                           minval=-bound, maxval=bound)
    b = jax.random.uniform(kb, (out_features,), jnp.float32,
                           minval=-bound, maxval=bound)
    return w, b


if __name__ == "__main__":
    # Module-consistent small shapes: encoder_size=32, num_layer=2, hidden=128,
    # output dim=1.  B=300 exercises a 2-step grid plus a ragged last block.
    B, E, H = 300, 32, 128

    key = jax.random.PRNGKey(0)
    kx, k1, k2, k3 = jax.random.split(key, 4)

    x = jax.random.normal(kx, (B, E), jnp.float32)
    w1, b1 = _torch_linear_init(k1, H, E)   # Linear(encoder_size, hidden)
    w2, b2 = _torch_linear_init(k2, H, H)   # Linear(hidden, hidden)
    w3, b3 = _torch_linear_init(k3, 1, H)   # Linear(hidden, 1)

    params = prepare_value_decoder_params(w1, b1, w2, b2, w3, b3)  # once, not per call
    value = value_decoder(x, params)
    value = jax.block_until_ready(value)

    # Pure-JAX reference matching the kernel's bf16-operand / f32-accumulation
    # math (the PyTorch forward with bf16 MXU inputs; ~1e-2-level deltas vs.
    # a pure-f32 torch forward are expected from the bf16 rounding).
    h = jnp.maximum(
        jnp.dot(x.astype(jnp.bfloat16), w1.T.astype(jnp.bfloat16),
                preferred_element_type=jnp.float32) + b1, 0.0)
    h = jnp.maximum(
        jnp.dot(h.astype(jnp.bfloat16), w2.T.astype(jnp.bfloat16),
                preferred_element_type=jnp.float32) + b2, 0.0)
    ref = jnp.sum(h * w3.reshape(1, H), axis=-1, keepdims=True) + b3

    assert value.shape == (B, 1)
    assert jnp.allclose(value, ref, atol=2e-3, rtol=2e-3)
    print("KERNEL_OK")
</pallas_src>

<mosaic_0001>
module attributes {stable_mosaic.version = 11 : i64} {
  func.func @value_decoder_kernel(%arg0: i32, %arg1: memref<256x32xf32, #tpu.memory_space<vmem>>, %arg2: memref<32x128xbf16, #tpu.memory_space<vmem>>, %arg3: memref<1x128xf32, #tpu.memory_space<vmem>>, %arg4: memref<128x128xbf16, #tpu.memory_space<vmem>>, %arg5: memref<128x1xf32, #tpu.memory_space<vmem>>, %arg6: memref<128x1xf32, #tpu.memory_space<vmem>>, %arg7: memref<1xf32, #tpu.memory_space<smem>>, %arg8: memref<1x256xf32, #tpu.memory_space<vmem>>) attributes {dimension_semantics = [#tpu.dimension_semantics<parallel>], iteration_bounds = array<i64: 2>, scalar_prefetch = 0 : i64, scratch_operands = 0 : i64, tpu.core_type = #tpu.core_type<tc>, window_params = [{transform_indices = @transform_0, window_bounds = array<i64: 256, 32>}, {pipeline_mode = #tpu.pipeline_mode<synchronous>, transform_indices = @transform_1, window_bounds = array<i64: 32, 128>}, {pipeline_mode = #tpu.pipeline_mode<synchronous>, transform_indices = @transform_2, window_bounds = array<i64: 1, 128>}, {pipeline_mode = #tpu.pipeline_mode<synchronous>, transform_indices = @transform_3, window_bounds = array<i64: 128, 128>}, {pipeline_mode = #tpu.pipeline_mode<synchronous>, transform_indices = @transform_4, window_bounds = array<i64: 128, 1>}, {pipeline_mode = #tpu.pipeline_mode<synchronous>, transform_indices = @transform_5, window_bounds = array<i64: 128, 1>}, {transform_indices = @transform_6, window_bounds = array<i64: 1>}, {transform_indices = @transform_7, window_bounds = array<i64: 1, 256>}]} {
    %c0 = arith.constant 0 : index
    %c0_0 = arith.constant 0 : index
    %0 = vector.load %arg1[%c0, %c0_0] : memref<256x32xf32, #tpu.memory_space<vmem>>, vector<256x32xf32>
    %1 = arith.truncf %0 : vector<256x32xf32> to vector<256x32xbf16>
    %c0_1 = arith.constant 0 : index
    %c0_2 = arith.constant 0 : index
    %2 = vector.load %arg2[%c0_1, %c0_2] : memref<32x128xbf16, #tpu.memory_space<vmem>>, vector<32x128xbf16>
    %cst = arith.constant dense<0.000000e+00> : vector<256x128xf32>
    %3 = tpu.matmul %1, %2, %cst {dimension_numbers = #tpu.dot_dimension_numbers<[1], [0], [0], [1], [0, 0, 1, 1], [], []>} : vector<256x32xbf16>, vector<32x128xbf16>, vector<256x128xf32> -> vector<256x128xf32>
    %c0_3 = arith.constant 0 : index
    %c0_4 = arith.constant 0 : index
    %4 = vector.load %arg3[%c0_3, %c0_4] : memref<1x128xf32, #tpu.memory_space<vmem>>, vector<1x128xf32>
    %5 = vector.broadcast %4 : vector<1x128xf32> to vector<256x128xf32>
    %6 = arith.addf %3, %5 : vector<256x128xf32>
    %cst_5 = arith.constant 0.000000e+00 : f32
    %7 = vector.broadcast %cst_5 : f32 to vector<256x128xf32>
    %8 = arith.maximumf %6, %7 : vector<256x128xf32>
    %c0_6 = arith.constant 0 : index
    %c0_7 = arith.constant 0 : index
    %9 = vector.load %arg4[%c0_6, %c0_7] : memref<128x128xbf16, #tpu.memory_space<vmem>>, vector<128x128xbf16>
    %10 = arith.truncf %8 : vector<256x128xf32> to vector<256x128xbf16>
    %cst_8 = arith.constant dense<0.000000e+00> : vector<128x256xf32>
    %11 = tpu.matmul %9, %10, %cst_8 {dimension_numbers = #tpu.dot_dimension_numbers<[1], [1], [0], [0], [0, 0, 1, 0], [], []>} : vector<128x128xbf16>, vector<256x128xbf16>, vector<128x256xf32> -> vector<128x256xf32>
    %c0_9 = arith.constant 0 : index
    %c0_10 = arith.constant 0 : index
    %12 = vector.load %arg5[%c0_9, %c0_10] : memref<128x1xf32, #tpu.memory_space<vmem>>, vector<128x1xf32>
    %13 = vector.broadcast %12 : vector<128x1xf32> to vector<128x256xf32>
    %14 = arith.addf %11, %13 : vector<128x256xf32>
    %cst_11 = arith.constant 0.000000e+00 : f32
    %15 = vector.broadcast %cst_11 : f32 to vector<128x256xf32>
    %16 = arith.maximumf %14, %15 : vector<128x256xf32>
    %c0_12 = arith.constant 0 : index
    %c0_13 = arith.constant 0 : index
    %17 = vector.load %arg6[%c0_12, %c0_13] : memref<128x1xf32, #tpu.memory_space<vmem>>, vector<128x1xf32>
    %18 = vector.broadcast %17 : vector<128x1xf32> to vector<128x256xf32>
    %19 = arith.mulf %16, %18 : vector<128x256xf32>
    %cst_14 = arith.constant dense<0.000000e+00> : vector<256xf32>
    %20 = vector.multi_reduction <add>, %19, %cst_14 [0] : vector<128x256xf32> to vector<256xf32>
    %21 = vector.shape_cast %20 : vector<256xf32> to vector<1x256xf32>
    %c0_15 = arith.constant 0 : index
    %22 = memref.load %arg7[%c0_15] : memref<1xf32, #tpu.memory_space<smem>>
    %23 = vector.broadcast %22 : f32 to vector<1x256xf32>
    %24 = arith.addf %21, %23 : vector<1x256xf32>
    %c0_16 = arith.constant 0 : index
    %c0_17 = arith.constant 0 : index
    %25 = vector.load %arg8[%c0_16, %c0_17] : memref<1x256xf32, #tpu.memory_space<vmem>>, vector<1x256xf32>
    tpu.vector_store %arg8[%c0_16, %c0_17], %24 {strides = array<i32>} : memref<1x256xf32, #tpu.memory_space<vmem>>, vector<1x256xf32>,
    return
  }
  func.func @transform_0(%arg0: i32) -> (i32, i32) {
    %c0_i32 = arith.constant 0 : i32
    %c0_i32_0 = arith.constant 0 : i32
    return %arg0, %c0_i32 : i32, i32
  }
  func.func @transform_1(%arg0: i32) -> (i32, i32) {
    %c0_i32 = arith.constant 0 : i32
    %c0_i32_0 = arith.constant 0 : i32
    %c0_i32_1 = arith.constant 0 : i32
    return %c0_i32, %c0_i32_0 : i32, i32
  }
  func.func @transform_2(%arg0: i32) -> (i32, i32) {
    %c0_i32 = arith.constant 0 : i32
    %c0_i32_0 = arith.constant 0 : i32
    %c0_i32_1 = arith.constant 0 : i32
    return %c0_i32, %c0_i32_0 : i32, i32
  }
  func.func @transform_3(%arg0: i32) -> (i32, i32) {
    %c0_i32 = arith.constant 0 : i32
    %c0_i32_0 = arith.constant 0 : i32
    %c0_i32_1 = arith.constant 0 : i32
    return %c0_i32, %c0_i32_0 : i32, i32
  }
  func.func @transform_4(%arg0: i32) -> (i32, i32) {
    %c0_i32 = arith.constant 0 : i32
    %c0_i32_0 = arith.constant 0 : i32
    %c0_i32_1 = arith.constant 0 : i32
    return %c0_i32, %c0_i32_0 : i32, i32
  }
  func.func @transform_5(%arg0: i32) -> (i32, i32) {
    %c0_i32 = arith.constant 0 : i32
    %c0_i32_0 = arith.constant 0 : i32
    %c0_i32_1 = arith.constant 0 : i32
    return %c0_i32, %c0_i32_0 : i32, i32
  }
  func.func @transform_6(%arg0: i32) -> i32 {
    %c0_i32 = arith.constant 0 : i32
    %c0_i32_0 = arith.constant 0 : i32
    return %c0_i32 : i32
  }
  func.func @transform_7(%arg0: i32) -> (i32, i32) {
    %c0_i32 = arith.constant 0 : i32
    %c0_i32_0 = arith.constant 0 : i32
    return %c0_i32, %arg0 : i32, i32
  }
}

</mosaic_0001>

<llo_original>
// kernel: tpu_custom_call.1
$region0: #{tpu_custom_call.1}
  #allocation0 [shape = 'u32[]', space=smem, size = 0x4, offset = 0x4, fixed_abs, tag = 'smem constant byte address 0x4 - core index']
  #allocation1 [shape = 'u32[144,128]{1,0:T(1,128)}', space=vmem, size = 0x12000, scoped, tag = 'internal scratch']
  #allocation2 [shape = 'f32[1]{0:T(128)S(6)}', space=smem, size = 0x200, scoped, tag = 'scoped memory for tpu_custom_call.1']
  %s0 = inlined_call_operand.vmem [shape: f32[300,32], index: 0, kind: input, shape index: {}]
  %s1 = inlined_call_operand.vmem [shape: bf16[32,128], index: 1, kind: input, shape index: {}]
  %s2 = inlined_call_operand.vmem [shape: f32[1,128], index: 2, kind: input, shape index: {}]
  %s3 = inlined_call_operand.vmem [shape: bf16[128,128], index: 3, kind: input, shape index: {}]
  %s4 = inlined_call_operand.vmem [shape: f32[128,1], index: 4, kind: input, shape index: {}]
  %s5 = inlined_call_operand.vmem [shape: f32[128,1], index: 5, kind: input, shape index: {}]
  %s6 = inlined_call_operand.<no memory space> [shape: f32[1], index: 6, kind: input, shape index: {}]
  %s7 = inlined_call_operand.hbm [shape: f32[1,300], index: 7, kind: output, shape index: {}]
  %s8 = sld [smem:[#allocation0]]
  $region61: #{tpu_custom_call.1} parent=0
    _
  %s10 = ssub.s32 1, %s8
  %s11 = scalar_select 0, %s10, %s8
  %12 = sst [smem:[#allocation2]] %s6
  $region1: #{tpu_custom_call.1} parent=0
    #allocation3 [shape = 'u8[2048]{0}', space=vmem, size = 0x800, scoped, tag = 'output window, operand 0']
    #allocation4 [shape = 's32[2]{0}', space=sflag, size = 0x8, scoped, tag = 'scoped memory for tpu_custom_call.1']
    %13 = vsyncpa [#allocation4], 0
    %s14 = scalar_lea.sflag [#allocation4], 1
    %15 = vsyncpa %s14, 0
    loop: start=0, step=1, limit=4
    $region2: #{tpu_custom_call.1} parent=1 // loop_pre_header
      _
    $region3: #{tpu_custom_call.1} parent=1 // loop_header
      %s17 = sphi 0, %s21
      %p18 = scmp.ge.s32.totalorder %s17, 4
      %s27 = sphi 0, %s29
      %s30 = sphi 0, %s27
      %s31 = sphi 0, %s30
      %s47 = sphi 0, %s31
      %s51 = sphi 0, %s51
      %s53 = sphi 0, %s51
      %s54 = sphi 0, %s53
      %s68 = sphi 0, %s54
      %s72 = sphi 0, %s72
      %s74 = sphi 0, %s72
      %s75 = sphi 0, %s74
      %s89 = sphi 0, %s75
      %s93 = sphi 0, %s93
      %s95 = sphi 0, %s93
      %s96 = sphi 0, %s95
      %s110 = sphi 0, %s96
      %s114 = sphi 0, %s114
      %s116 = sphi 0, %s114
      %s117 = sphi 0, %s116
      %s131 = sphi 0, %s117
      %s135 = sphi 0, %s135
      %s137 = sphi 0, %s135
      %s138 = sphi 0, %s137
      %s152 = sphi 0, %s138
      %s156 = sphi 0, %s156
      %s158 = sphi 0, %s156
      %s159 = sphi 0, %s158
      %s173 = sphi 0, %s159
      %s179 = sphi 0, %s181
      %s182 = sphi 0, %s179
      %s183 = sphi 0, %s182
      %s199 = sphi 0, %s183
    $region4: #{tpu_custom_call.1} parent=1 // loop_header_branch
      %20 = sbr.rel (%p18) target = $region8
    $region5: #{tpu_custom_call.1} parent=1 // loop_body
      %s22 = ssub.s32 %s17, 1
      %s23 = ssub.s32 %s17, 2
      %s24 = sadd.s32 %s17, 1
      %s25 = ssub.s32 %s17, %s24
      %p26 = scmp.eq.s32.totalorder %s25, 0
      %s28 = sadd.s32 %s27, 1
      %s29 = scalar_select %p26, %s27, %s28
      %p32 = pneg %p26
      %p33 = scmp.eq.s32.totalorder %s17, 1
      %p34 = por %p32, %p33
      %p35 = scmp.ne.s32.totalorder %s27, %s30
      %p36 = scmp.eq.s32.totalorder %s17, 0
      %p37 = por %p35, %p36
      %p38 = scmp.ne.s32.totalorder %s27, %s30
      %p39 = scmp.eq.s32.totalorder %s22, 1
      %p40 = por %p38, %p39
      %p41 = scmp.ne.s32.totalorder %s30, %s31
      %p42 = scmp.eq.s32.totalorder %s22, 0
      %p43 = por %p41, %p42
      %p44 = scmp.ne.s32.totalorder %s30, %s31
      %p45 = scmp.eq.s32.totalorder %s23, 1
      %p46 = por %p44, %p45
      %p48 = scmp.ne.s32.totalorder %s31, %s47
      %p49 = scmp.eq.s32.totalorder %s23, 0
      %p50 = por %p48, %p49
      %s52 = sadd.s32 %s51, 1
      %p55 = scmp.eq.s32.totalorder %s17, 1
      %p56 = scmp.ne.s32.totalorder %s51, %s53
      %p57 = scmp.eq.s32.totalorder %s17, 0
      %p58 = por %p56, %p57
      %p59 = scmp.ne.s32.totalorder %s51, %s53
      %p60 = scmp.eq.s32.totalorder %s22, 1
      %p61 = por %p59, %p60
      %p62 = scmp.ne.s32.totalorder %s53, %s54
      %p63 = scmp.eq.s32.totalorder %s22, 0
      %p64 = por %p62, %p63
      %p65 = scmp.ne.s32.totalorder %s53, %s54
      %p66 = scmp.eq.s32.totalorder %s23, 1
      %p67 = por %p65, %p66
      %p69 = scmp.ne.s32.totalorder %s54, %s68
      %p70 = scmp.eq.s32.totalorder %s23, 0
      %p71 = por %p69, %p70
      %s73 = sadd.s32 %s72, 1
      %p76 = scmp.eq.s32.totalorder %s17, 1
      %p77 = scmp.ne.s32.totalorder %s72, %s74
      %p78 = scmp.eq.s32.totalorder %s17, 0
      %p79 = por %p77, %p78
      %p80 = scmp.ne.s32.totalorder %s72, %s74
      %p81 = scmp.eq.s32.totalorder %s22, 1
      %p82 = por %p80, %p81
      %p83 = scmp.ne.s32.totalorder %s74, %s75
      %p84 = scmp.eq.s32.totalorder %s22, 0
      %p85 = por %p83, %p84
      %p86 = scmp.ne.s32.totalorder %s74, %s75
      %p87 = scmp.eq.s32.totalorder %s23, 1
      %p88 = por %p86, %p87
      %p90 = scmp.ne.s32.totalorder %s75, %s89
      %p91 = scmp.eq.s32.totalorder %s23, 0
      %p92 = por %p90, %p91
      %s94 = sadd.s32 %s93, 1
      %p97 = scmp.eq.s32.totalorder %s17, 1
      %p98 = scmp.ne.s32.totalorder %s93, %s95
      %p99 = scmp.eq.s32.totalorder %s17, 0
      %p100 = por %p98, %p99
      %p101 = scmp.ne.s32.totalorder %s93, %s95
      %p102 = scmp.eq.s32.totalorder %s22, 1
      %p103 = por %p101, %p102
      %p104 = scmp.ne.s32.totalorder %s95, %s96
      %p105 = scmp.eq.s32.totalorder %s22, 0
      %p106 = por %p104, %p105
      %p107 = scmp.ne.s32.totalorder %s95, %s96
      %p108 = scmp.eq.s32.totalorder %s23, 1
      %p109 = por %p107, %p108
      %p111 = scmp.ne.s32.totalorder %s96, %s110
      %p112 = scmp.eq.s32.totalorder %s23, 0
      %p113 = por %p111, %p112
      %s115 = sadd.s32 %s114, 1
      %p118 = scmp.eq.s32.totalorder %s17, 1
      %p119 = scmp.ne.s32.totalorder %s114, %s116
      %p120 = scmp.eq.s32.totalorder %s17, 0
      %p121 = por %p119, %p120
      %p122 = scmp.ne.s32.totalorder %s114, %s116
      %p123 = scmp.eq.s32.totalorder %s22, 1
      %p124 = por %p122, %p123
      %p125 = scmp.ne.s32.totalorder %s116, %s117
      %p126 = scmp.eq.s32.totalorder %s22, 0
      %p127 = por %p125, %p126
      %p128 = scmp.ne.s32.totalorder %s116, %s117
      %p129 = scmp.eq.s32.totalorder %s23, 1
      %p130 = por %p128, %p129
      %p132 = scmp.ne.s32.totalorder %s117, %s131
      %p133 = scmp.eq.s32.totalorder %s23, 0
      %p134 = por %p132, %p133
      %s136 = sadd.s32 %s135, 1
      %p139 = scmp.eq.s32.totalorder %s17, 1
      %p140 = scmp.ne.s32.totalorder %s135, %s137
      %p141 = scmp.eq.s32.totalorder %s17, 0
      %p142 = por %p140, %p141
      %p143 = scmp.ne.s32.totalorder %s135, %s137
      %p144 = scmp.eq.s32.totalorder %s22, 1
      %p145 = por %p143, %p144
      %p146 = scmp.ne.s32.totalorder %s137, %s138
      %p147 = scmp.eq.s32.totalorder %s22, 0
      %p148 = por %p146, %p147
      %p149 = scmp.ne.s32.totalorder %s137, %s138
      %p150 = scmp.eq.s32.totalorder %s23, 1
      %p151 = por %p149, %p150
      %p153 = scmp.ne.s32.totalorder %s138, %s152
      %p154 = scmp.eq.s32.totalorder %s23, 0
      %p155 = por %p153, %p154
      %s157 = sadd.s32 %s156, 1
      %p160 = scmp.eq.s32.totalorder %s17, 1
      %p161 = scmp.ne.s32.totalorder %s156, %s158
      %p162 = scmp.eq.s32.totalorder %s17, 0
      %p163 = por %p161, %p162
      %p164 = scmp.ne.s32.totalorder %s156, %s158
      %p165 = scmp.eq.s32.totalorder %s22, 1
      %p166 = por %p164, %p165
      %p167 = scmp.ne.s32.totalorder %s158, %s159
      %p168 = scmp.eq.s32.totalorder %s22, 0
      %p169 = por %p167, %p168
      %p170 = scmp.ne.s32.totalorder %s158, %s159
      %p171 = scmp.eq.s32.totalorder %s23, 1
      %p172 = por %p170, %p171
      %p174 = scmp.ne.s32.totalorder %s159, %s173
      %p175 = scmp.eq.s32.totalorder %s23, 0
      %p176 = por %p174, %p175
      %s177 = ssub.s32 %s17, %s24
      %p178 = scmp.eq.s32.totalorder %s177, 0
      %s180 = sadd.s32 %s179, 1
      %s181 = scalar_select %p178, %s179, %s180
      %p184 = pneg %p178
      %p185 = scmp.eq.s32.totalorder %s17, 1
      %p186 = por %p184, %p185
      %p187 = scmp.ne.s32.totalorder %s179, %s182
      %p188 = scmp.eq.s32.totalorder %s17, 0
      %p189 = por %p187, %p188
      %p190 = scmp.ne.s32.totalorder %s179, %s182
      %p191 = scmp.eq.s32.totalorder %s22, 1
      %p192 = por %p190, %p191
      %p193 = scmp.ne.s32.totalorder %s182, %s183
      %p194 = scmp.eq.s32.totalorder %s22, 0
      %p195 = por %p193, %p194
      %p196 = scmp.ne.s32.totalorder %s182, %s183
      %p197 = scmp.eq.s32.totalorder %s23, 1
      %p198 = por %p196, %p197
      %p200 = scmp.ne.s32.totalorder %s183, %s199
      %p201 = scmp.eq.s32.totalorder %s23, 0
      %p202 = por %p200, %p201
      %p203 = scmp.le.s32.totalorder 1, %s17
      %p204 = scmp.lt.s32.totalorder %s17, 3
      %p205 = pnand %p203, %p204
      %p206 = pneg %p205
      // Predicated region
      $region9: #{tpu_custom_call.1} parent=5 // pred_check
        _
      $region10: #{tpu_custom_call.1} parent=5 // pred_check_branch
        %208 = sbr.rel (%p205) target = $region12
      $region11: #{tpu_custom_call.1} parent=5 // pred_region
        %s209 = ssub.s32 %s17, 1
        // Predicated region
        $region13: #{tpu_custom_call.1} parent=11 // pred_check
          %p210 = pneg %p64
        $region14: #{tpu_custom_call.1} parent=11 // pred_check_branch
          %212 = sbr.rel (%p210) target = $region16
        $region15: #{tpu_custom_call.1} parent=11 // pred_region
          _
        $region16: #{tpu_custom_call.1} parent=11 // pred_fallthru
          _
        // Predicated region
        $region17: #{tpu_custom_call.1} parent=11 // pred_check
          %p213 = pneg %p85
        $region18: #{tpu_custom_call.1} parent=11 // pred_check_branch
          %215 = sbr.rel (%p213) target = $region20
        $region19: #{tpu_custom_call.1} parent=11 // pred_region
          _
        $region20: #{tpu_custom_call.1} parent=11 // pred_fallthru
          _
        // Predicated region
        $region21: #{tpu_custom_call.1} parent=11 // pred_check
          %p216 = pneg %p106
        $region22: #{tpu_custom_call.1} parent=11 // pred_check_branch
          %218 = sbr.rel (%p216) target = $region24
        $region23: #{tpu_custom_call.1} parent=11 // pred_region
          _
        $region24: #{tpu_custom_call.1} parent=11 // pred_fallthru
          _
        // Predicated region
        $region25: #{tpu_custom_call.1} parent=11 // pred_check
          %p219 = pneg %p127
        $region26: #{tpu_custom_call.1} parent=11 // pred_check_branch
          %221 = sbr.rel (%p219) target = $region28
        $region27: #{tpu_custom_call.1} parent=11 // pred_region
          _
        $region28: #{tpu_custom_call.1} parent=11 // pred_fallthru
          _
        // Predicated region
        $region29: #{tpu_custom_call.1} parent=11 // pred_check
          %p222 = pneg %p148
        $region30: #{tpu_custom_call.1} parent=11 // pred_check_branch
          %224 = sbr.rel (%p222) target = $region32
        $region31: #{tpu_custom_call.1} parent=11 // pred_region
          _
        $region32: #{tpu_custom_call.1} parent=11 // pred_fallthru
          _
        // Predicated region
        $region33: #{tpu_custom_call.1} parent=11 // pred_check
          %p225 = pneg %p169
        $region34: #{tpu_custom_call.1} parent=11 // pred_check_branch
          %227 = sbr.rel (%p225) target = $region36
        $region35: #{tpu_custom_call.1} parent=11 // pred_region
          _
        $region36: #{tpu_custom_call.1} parent=11 // pred_fallthru
          _
      $region12: #{tpu_custom_call.1} parent=5 // pred_fallthru
        _
      %p228 = scmp.lt.s32.totalorder %s17, 2
      // Predicated region
      $region37: #{tpu_custom_call.1} parent=5 // pred_check
        %p229 = pneg %p228
      $region38: #{tpu_custom_call.1} parent=5 // pred_check_branch
        %231 = sbr.rel (%p229) target = $region40
      $region39: #{tpu_custom_call.1} parent=5 // pred_region
        // Predicated region
        $region41: #{tpu_custom_call.1} parent=39 // pred_check
          %p232 = pneg %p37
        $region42: #{tpu_custom_call.1} parent=39 // pred_check_branch
          %234 = sbr.rel (%p232) target = $region44
        $region43: #{tpu_custom_call.1} parent=39 // pred_region
          %s235 = smul.u32 32, %s17
          %s236 = ssub.s32 38, %s235
          %p237 = scmp.lt.s32.totalorder %s236, 32
          %s238 = scalar_select %p237, %s236, 32
          %s239 = smul.u32 128, %s238
          %p240 = scmp.lt.s32.totalorder %s235, 37
          %s241 = scalar_select %p240, %s235, 37
          %s242 = smul.addr %s241, 8
          %s243 = scalar_lea.vmem %s0, %s242
          %s244 = smul.u32 32, %s17
          %s245 = ssub.s32 38, %s244
          %p246 = scmp.lt.s32.totalorder %s245, 32
          %s247 = scalar_select %p246, %s245, 32
          %s248 = smul.u32 128, %s247
        $region44: #{tpu_custom_call.1} parent=39 // pred_fallthru
          _
      $region40: #{tpu_custom_call.1} parent=5 // pred_fallthru
        _
      %p249 = scmp.le.s32.totalorder 1, %s17
      %p250 = scmp.lt.s32.totalorder %s17, 3
      %p251 = pnand %p249, %p250
      %p252 = pneg %p251
      // Predicated region
      $region45: #{tpu_custom_call.1} parent=5 // pred_check
        _
      $region46: #{tpu_custom_call.1} parent=5 // pred_check_branch
        %254 = sbr.rel (%p251) target = $region48
      $region47: #{tpu_custom_call.1} parent=5 // pred_region
        %s255 = ssub.s32 %s17, 1
        %s256 = smul.u32 32, %s22
        %s257 = ssub.s32 38, %s256
        %p258 = scmp.lt.s32.totalorder %s257, 32
        %s259 = scalar_select %p258, %s257, 32
        %s260 = smul.u32 128, %s259
        %p261 = scmp.lt.s32.totalorder %s256, 37
        %s262 = scalar_select %p261, %s256, 37
        %s263 = smul.addr %s262, 8
        %s264 = scalar_lea.vmem %s0, %s263
        %p265 = pneg %p43
        %p266 = pneg %p40
        %p267 = pneg %p64
        %p268 = pneg %p61
        %p269 = pneg %p85
        %p270 = pneg %p82
        %p271 = pneg %p106
        %p272 = pneg %p103
        %p273 = pneg %p127
        %p274 = pneg %p124
        %p275 = pneg %p148
        %p276 = pneg %p145
        %p277 = pneg %p169
        %p278 = pneg %p166
        %p279 = pneg %p195
        %p280 = pneg %p192
        %s281 = sand.u32 %s182, 1
        %s282 = scalar_lea.sflag [#allocation4], %s281
        %s283 = sand.u32 %s182, 1
        %s284 = smul.addr %s283, 2
        %s285 = scalar_lea.vmem [#allocation3], %s284
        %s286 = smul.u32 32, %s22
        %s287 = ssub.s32 38, %s286
        %p288 = scmp.lt.s32.totalorder %s287, 32
        %s289 = scalar_select %p288, %s287, 32
        %s290 = smul.u32 128, %s289
        %p291 = scmp.lt.s32.totalorder %s286, 37
        %s292 = scalar_select %p291, %s286, 37
        %s293 = smul.addr %s292, 8
        %s294 = scalar_lea.vmem %s0, %s293
        %s295 = smul.u32 32, %s22
        %s296 = ssub.s32 38, %s295
        %p297 = scmp.lt.s32.totalorder %s296, 32
        %s298 = scalar_select %p297, %s296, 32
        %s299 = smul.u32 128, %s298
        %s300 = smul.u32 2, %s22
        %s301 = ssub.s32 3, %s300
        %p302 = scmp.lt.s32.totalorder %s301, 2
        %s303 = scalar_select %p302, %s301, 2
        %s304 = smul.u32 16, %s303
        %v306 = vld [vmem:[%s294] sm:$0xff]
        %v307 = vld [vmem:[%s294 + $0x8] sm:$0xff]
        %v308 = vld [vmem:[%s294 + $0x10] sm:$0xff]
        %v309 = vld [vmem:[%s294 + $0x18] sm:$0xff]
        %v310 = vld [vmem:[%s294 + $0x20] sm:$0xff]
        %v311 = vld [vmem:[%s294 + $0x28] sm:$0xff]
        %v312 = vld [vmem:[%s294 + $0x30] sm:$0xff]
        %v313 = vld [vmem:[%s294 + $0x38] sm:$0xff]
        %v314 = vld [vmem:[%s294 + $0x40] sm:$0xff]
        %v315 = vld [vmem:[%s294 + $0x48] sm:$0xff]
        %v316 = vld [vmem:[%s294 + $0x50] sm:$0xff]
        %v317 = vld [vmem:[%s294 + $0x58] sm:$0xff]
        %v318 = vld [vmem:[%s294 + $0x60] sm:$0xff]
        %v319 = vld [vmem:[%s294 + $0x68] sm:$0xff]
        %v320 = vld [vmem:[%s294 + $0x70] sm:$0xff]
        %v321 = vld [vmem:[%s294 + $0x78] sm:$0xff]
        %v322 = vld [vmem:[%s294 + $0x80] sm:$0xff]
        %v323 = vld [vmem:[%s294 + $0x88] sm:$0xff]
        %v324 = vld [vmem:[%s294 + $0x90] sm:$0xff]
        %v325 = vld [vmem:[%s294 + $0x98] sm:$0xff]
        %v326 = vld [vmem:[%s294 + $0xa0] sm:$0xff]
        %v327 = vld [vmem:[%s294 + $0xa8] sm:$0xff]
        %v328 = vld [vmem:[%s294 + $0xb0] sm:$0xff]
        %v329 = vld [vmem:[%s294 + $0xb8] sm:$0xff]
        %v330 = vld [vmem:[%s294 + $0xc0] sm:$0xff]
        %v331 = vld [vmem:[%s294 + $0xc8] sm:$0xff]
        %v332 = vld [vmem:[%s294 + $0xd0] sm:$0xff]
        %v333 = vld [vmem:[%s294 + $0xd8] sm:$0xff]
        %v334 = vld [vmem:[%s294 + $0xe0] sm:$0xff]
        %v335 = vld [vmem:[%s294 + $0xe8] sm:$0xff]
        %v336 = vld [vmem:[%s294 + $0xf0] sm:$0xff]
        %v337 = vld [vmem:[%s294 + $0xf8] sm:$0xff]
        %v338 = vpack.c.bf16 %v307, %v306
        %v339 = vpack.c.bf16 %v309, %v308
        %v340 = vpack.c.bf16 %v311, %v310
        %v341 = vpack.c.bf16 %v313, %v312
        %v342 = vpack.c.bf16 %v315, %v314
        %v343 = vpack.c.bf16 %v317, %v316
        %v344 = vpack.c.bf16 %v319, %v318
        %v345 = vpack.c.bf16 %v321, %v320
        %v346 = vpack.c.bf16 %v323, %v322
        %v347 = vpack.c.bf16 %v325, %v324
        %v348 = vpack.c.bf16 %v327, %v326
        %v349 = vpack.c.bf16 %v329, %v328
        %v350 = vpack.c.bf16 %v331, %v330
        %v351 = vpack.c.bf16 %v333, %v332
        %v352 = vpack.c.bf16 %v335, %v334
        %v353 = vpack.c.bf16 %v337, %v336
        %v354 = vld [vmem:[%s1] sm:$0xf]
        %v355 = vld [vmem:[%s1 + $0x4] sm:$0xf]
        %v356 = vld [vmem:[%s1 + $0x8] sm:$0xf]
        %v357 = vld [vmem:[%s1 + $0xc] sm:$0xf]
        %v358 = vld [vmem:[%s2] sm:$0x1]
        %v360 = vlaneseq
        %v361 = vshrl.u32 %v360, 7
        %v362 = vsub.s32 0, %v361
        %v363 = vrot.slane %v358, %v362
        %v369 = vunpack.c.l.b16 %v354
        %v370 = vunpack.c.l.b16 %v355
        %v371 = vunpack.c.l.b16 %v356
        %v372 = vunpack.c.l.b16 %v357
        %v373 = vpack.c.b16 %v370, %v369
        %v374 = vpack.c.b16 %v372, %v371
        %vm377 = vcmask 261120
        %v379 = vsel %vm377, %v338, 0
        %v382 = vsel %vm377, %v339, 0
        %v385 = vsel %vm377, %v340, 0
        %v388 = vsel %vm377, %v341, 0
        %v391 = vsel %vm377, %v342, 0
        %v394 = vsel %vm377, %v343, 0
        %v397 = vsel %vm377, %v344, 0
        %v400 = vsel %vm377, %v345, 0
        %v403 = vsel %vm377, %v346, 0
        %v406 = vsel %vm377, %v347, 0
        %v409 = vsel %vm377, %v348, 0
        %v412 = vsel %vm377, %v349, 0
        %v415 = vsel %vm377, %v350, 0
        %v418 = vsel %vm377, %v351, 0
        %v421 = vsel %vm377, %v352, 0
        %v424 = vsel %vm377, %v353, 0
        %426 = vmatprep.subr.bf16.mxu0 0
        %427 = vmatpush1.bf16.msra.mxu0 %v373
        %428 = vmatprep.subr.bf16.mxu0 0
        %429 = vmatpush1.bf16.msra.mxu0 %v374
        %430 = vmatprep.subr.bf16.mxu0 0
        %431 = vmatpush1.bf16.msra.mxu0 0
        %432 = vmatprep.subr.bf16.mxu0 0
        %433 = vmatpush1.bf16.msra.mxu0 0
        %434 = vmatprep.subr.bf16.mxu0 0
        %435 = vmatpush1.bf16.msra.mxu0 0
        %436 = vmatprep.subr.bf16.mxu0 0
        %437 = vmatpush1.bf16.msra.mxu0 0
        %438 = vmatprep.subr.bf16.mxu0 0
        %439 = vmatpush1.bf16.msra.mxu0 0
        %440 = vmatprep.subr.bf16.mxu0 0
        %441 = vmatpush1.bf16.msra.mxu0 0
        %442 = vmatprep.subr.bf16.mxu0 0
        %443 = vmatpush1.bf16.msra.mxu0 0
        %444 = vmatprep.subr.bf16.mxu0 0
        %445 = vmatpush1.bf16.msra.mxu0 0
        %446 = vmatprep.subr.bf16.mxu0 0
        %447 = vmatpush1.bf16.msra.mxu0 0
        %448 = vmatprep.subr.bf16.mxu0 0
        %449 = vmatpush1.bf16.msra.mxu0 0
        %450 = vmatprep.subr.bf16.mxu0 0
        %451 = vmatpush1.bf16.msra.mxu0 0
        %452 = vmatprep.subr.bf16.mxu0 0
        %453 = vmatpush1.bf16.msra.mxu0 0
        %454 = vmatprep.subr.bf16.mxu0 0
        %455 = vmatpush1.bf16.msra.mxu0 0
        %456 = vmatprep.subr.bf16.mxu0 0
        %457 = vmatpush1.bf16.msra.mxu0 0
        %458 = vmatprep.mubr.bf16.mxu0 0
        %459 = vmatmul.mubr.bf16.gmra.mrb[0].mxu0 %v379
        %v460 = vpop.f32.mrb[0].mxu0
        %v461 = vadd.f32 %v363, %v460
        %v462 = vpop.f32.mrb[0].mxu0
        %v463 = vpop.f32.mrb[0].mxu0
        %v464 = vadd.f32 %v363, %v463
        %v465 = vpop.f32.mrb[0].mxu0
        %466 = vmatprep.mubr.bf16.mxu0 0
        %467 = vmatmul.mubr.bf16.gmra.mrb[0].mxu0 %v382
        %v468 = vpop.f32.mrb[0].mxu0
        %v469 = vadd.f32 %v363, %v468
        %v470 = vpop.f32.mrb[0].mxu0
        %v471 = vpop.f32.mrb[0].mxu0
        %v472 = vadd.f32 %v363, %v471
        %v473 = vpop.f32.mrb[0].mxu0
        %474 = vmatprep.mubr.bf16.mxu0 0
        %475 = vmatmul.mubr.bf16.gmra.mrb[0].mxu0 %v385
        %v476 = vpop.f32.mrb[0].mxu0
        %v477 = vadd.f32 %v363, %v476
        %v478 = vpop.f32.mrb[0].mxu0
        %v479 = vpop.f32.mrb[0].mxu0
        %v480 = vadd.f32 %v363, %v479
        %v481 = vpop.f32.mrb[0].mxu0
        %482 = vmatprep.mubr.bf16.mxu0 0
        %483 = vmatmul.mubr.bf16.gmra.mrb[0].mxu0 %v388
        %v484 = vpop.f32.mrb[0].mxu0
        %v485 = vadd.f32 %v363, %v484
        %v486 = vpop.f32.mrb[0].mxu0
        %v487 = vpop.f32.mrb[0].mxu0
        %v488 = vadd.f32 %v363, %v487
        %v489 = vpop.f32.mrb[0].mxu0
        %490 = vmatprep.mubr.bf16.mxu0 0
        %491 = vmatmul.mubr.bf16.gmra.mrb[0].mxu0 %v391
        %v492 = vpop.f32.mrb[0].mxu0
        %v493 = vadd.f32 %v363, %v492
        %v494 = vpop.f32.mrb[0].mxu0
        %v495 = vpop.f32.mrb[0].mxu0
        %v496 = vadd.f32 %v363, %v495
        %v497 = vpop.f32.mrb[0].mxu0
        %498 = vmatprep.mubr.bf16.mxu0 0
        %499 = vmatmul.mubr.bf16.gmra.mrb[0].mxu0 %v394
        %v500 = vpop.f32.mrb[0].mxu0
        %v501 = vadd.f32 %v363, %v500
        %v502 = vpop.f32.mrb[0].mxu0
        %v503 = vpop.f32.mrb[0].mxu0
        %v504 = vadd.f32 %v363, %v503
        %v505 = vpop.f32.mrb[0].mxu0
        %506 = vmatprep.mubr.bf16.mxu0 0
        %507 = vmatmul.mubr.bf16.gmra.mrb[0].mxu0 %v397
        %v508 = vpop.f32.mrb[0].mxu0
        %v509 = vadd.f32 %v363, %v508
        %v510 = vpop.f32.mrb[0].mxu0
        %v511 = vpop.f32.mrb[0].mxu0
        %v512 = vadd.f32 %v363, %v511
        %v513 = vpop.f32.mrb[0].mxu0
        %514 = vmatprep.mubr.bf16.mxu0 0
        %515 = vmatmul.mubr.bf16.gmra.mrb[0].mxu0 %v400
        %v516 = vpop.f32.mrb[0].mxu0
        %v517 = vadd.f32 %v363, %v516
        %v518 = vpop.f32.mrb[0].mxu0
        %v519 = vpop.f32.mrb[0].mxu0
        %v520 = vadd.f32 %v363, %v519
        %v521 = vpop.f32.mrb[0].mxu0
        %522 = vmatprep.mubr.bf16.mxu0 0
        %523 = vmatmul.mubr.bf16.gmra.mrb[0].mxu0 %v403
        %v524 = vpop.f32.mrb[0].mxu0
        %v525 = vadd.f32 %v363, %v524
        %v526 = vpop.f32.mrb[0].mxu0
        %v527 = vpop.f32.mrb[0].mxu0
        %v528 = vadd.f32 %v363, %v527
        %v529 = vpop.f32.mrb[0].mxu0
        %530 = vmatprep.mubr.bf16.mxu0 0
        %531 = vmatmul.mubr.bf16.gmra.mrb[0].mxu0 %v406
        %v532 = vpop.f32.mrb[0].mxu0
        %v533 = vadd.f32 %v363, %v532
        %v534 = vpop.f32.mrb[0].mxu0
        %v535 = vpop.f32.mrb[0].mxu0
        %v536 = vadd.f32 %v363, %v535
        %v537 = vpop.f32.mrb[0].mxu0
        %538 = vmatprep.mubr.bf16.mxu0 0
        %539 = vmatmul.mubr.bf16.gmra.mrb[0].mxu0 %v409
        %v540 = vpop.f32.mrb[0].mxu0
        %v541 = vadd.f32 %v363, %v540
        %v542 = vpop.f32.mrb[0].mxu0
        %v543 = vpop.f32.mrb[0].mxu0
        %v544 = vadd.f32 %v363, %v543
        %v545 = vpop.f32.mrb[0].mxu0
        %546 = vmatprep.mubr.bf16.mxu0 0
        %547 = vmatmul.mubr.bf16.gmra.mrb[0].mxu0 %v412
        %v548 = vpop.f32.mrb[0].mxu0
        %v549 = vadd.f32 %v363, %v548
        %v550 = vpop.f32.mrb[0].mxu0
        %v551 = vpop.f32.mrb[0].mxu0
        %v552 = vadd.f32 %v363, %v551
        %v553 = vpop.f32.mrb[0].mxu0
        %554 = vmatprep.mubr.bf16.mxu0 0
        %555 = vmatmul.mubr.bf16.gmra.mrb[0].mxu0 %v415
        %v556 = vpop.f32.mrb[0].mxu0
        %v557 = vadd.f32 %v363, %v556
        %v558 = vpop.f32.mrb[0].mxu0
        %v559 = vpop.f32.mrb[0].mxu0
        %v560 = vadd.f32 %v363, %v559
        %v561 = vpop.f32.mrb[0].mxu0
        %562 = vmatprep.mubr.bf16.mxu0 0
        %563 = vmatmul.mubr.bf16.gmra.mrb[0].mxu0 %v418
        %v564 = vpop.f32.mrb[0].mxu0
        %v565 = vadd.f32 %v363, %v564
        %v566 = vpop.f32.mrb[0].mxu0
        %v567 = vpop.f32.mrb[0].mxu0
        %v568 = vadd.f32 %v363, %v567
        %v569 = vpop.f32.mrb[0].mxu0
        %570 = vmatprep.mubr.bf16.mxu0 0
        %571 = vmatmul.mubr.bf16.gmra.mrb[0].mxu0 %v421
        %v572 = vpop.f32.mrb[0].mxu0
        %v573 = vadd.f32 %v363, %v572
        %v574 = vpop.f32.mrb[0].mxu0
        %v575 = vpop.f32.mrb[0].mxu0
        %v576 = vadd.f32 %v363, %v575
        %v577 = vpop.f32.mrb[0].mxu0
        %578 = vmatprep.mubr.bf16.mxu0 0
        %579 = vmatmul.mubr.bf16.gmra.mrb[0].mxu0 %v424
        %v580 = vpop.f32.mrb[0].mxu0
        %v581 = vadd.f32 %v363, %v580
        %v582 = vpop.f32.mrb[0].mxu0
        %v583 = vpop.f32.mrb[0].mxu0
        %v584 = vadd.f32 %v363, %v583
        %v585 = vpop.f32.mrb[0].mxu0
        %586 = vdwg.mxu0
        %v587 = vmax.f32 %v461, 0.0
        %v588 = vmax.f32 %v464, 0.0
        %v589 = vmax.f32 %v469, 0.0
        %v590 = vmax.f32 %v472, 0.0
        %v591 = vmax.f32 %v477, 0.0
        %v592 = vmax.f32 %v480, 0.0
        %v593 = vmax.f32 %v485, 0.0
        %v594 = vmax.f32 %v488, 0.0
        %v595 = vmax.f32 %v493, 0.0
        %v596 = vmax.f32 %v496, 0.0
        %v597 = vmax.f32 %v501, 0.0
        %v598 = vmax.f32 %v504, 0.0
        %v599 = vmax.f32 %v509, 0.0
        %v600 = vmax.f32 %v512, 0.0
        %v601 = vmax.f32 %v517, 0.0
        %v602 = vmax.f32 %v520, 0.0
        %v603 = vmax.f32 %v525, 0.0
        %v604 = vmax.f32 %v528, 0.0
        %v605 = vmax.f32 %v533, 0.0
        %v606 = vmax.f32 %v536, 0.0
        %v607 = vmax.f32 %v541, 0.0
        %v608 = vmax.f32 %v544, 0.0
        %v609 = vmax.f32 %v549, 0.0
        %v610 = vmax.f32 %v552, 0.0
        %v611 = vmax.f32 %v557, 0.0
        %v612 = vmax.f32 %v560, 0.0
        %v613 = vmax.f32 %v565, 0.0
        %v614 = vmax.f32 %v568, 0.0
        %v615 = vmax.f32 %v573, 0.0
        %v616 = vmax.f32 %v576, 0.0
        %v617 = vmax.f32 %v581, 0.0
        %v618 = vmax.f32 %v584, 0.0
        %v619 = vld [vmem:[%s3] sm:$0xf]
        %v620 = vld [vmem:[%s3 + $0x4] sm:$0xf]
        %v621 = vld [vmem:[%s3 + $0x8] sm:$0xf]
        %v622 = vld [vmem:[%s3 + $0xc] sm:$0xf]
        %v623 = vld [vmem:[%s3 + $0x10] sm:$0xf]
        %v624 = vld [vmem:[%s3 + $0x14] sm:$0xf]
        %v625 = vld [vmem:[%s3 + $0x18] sm:$0xf]
        %v626 = vld [vmem:[%s3 + $0x1c] sm:$0xf]
        %v627 = vld [vmem:[%s3 + $0x20] sm:$0xf]
        %v628 = vld [vmem:[%s3 + $0x24] sm:$0xf]
        %v629 = vld [vmem:[%s3 + $0x28] sm:$0xf]
        %v630 = vld [vmem:[%s3 + $0x2c] sm:$0xf]
        %v631 = vld [vmem:[%s3 + $0x30] sm:$0xf]
        %v632 = vld [vmem:[%s3 + $0x34] sm:$0xf]
        %v633 = vld [vmem:[%s3 + $0x38] sm:$0xf]
        %v634 = vld [vmem:[%s3 + $0x3c] sm:$0xf]
        %v635 = vpack.c.bf16 %v588, %v587
        %v636 = vpack.c.bf16 %v590, %v589
        %v637 = vpack.c.bf16 %v592, %v591
        %v638 = vpack.c.bf16 %v594, %v593
        %v639 = vpack.c.bf16 %v596, %v595
        %v640 = vpack.c.bf16 %v598, %v597
        %v641 = vpack.c.bf16 %v600, %v599
        %v642 = vpack.c.bf16 %v602, %v601
        %v643 = vpack.c.bf16 %v604, %v603
        %v644 = vpack.c.bf16 %v606, %v605
        %v645 = vpack.c.bf16 %v608, %v607
        %v646 = vpack.c.bf16 %v610, %v609
        %v647 = vpack.c.bf16 %v612, %v611
        %v648 = vpack.c.bf16 %v614, %v613
        %v649 = vpack.c.bf16 %v616, %v615
        %v650 = vpack.c.bf16 %v618, %v617
        %v651 = vld [vmem:[%s4] sm:$0xff]
        %v652 = vld [vmem:[%s4 + $0x8] sm:$0xff]
        %v653 = vld [vmem:[%s4 + $0x10] sm:$0xff]
        %v654 = vld [vmem:[%s4 + $0x18] sm:$0xff]
        %v655 = vld [vmem:[%s4 + $0x20] sm:$0xff]
        %v656 = vld [vmem:[%s4 + $0x28] sm:$0xff]
        %v657 = vld [vmem:[%s4 + $0x30] sm:$0xff]
        %v658 = vld [vmem:[%s4 + $0x38] sm:$0xff]
        %v659 = vld [vmem:[%s4 + $0x40] sm:$0xff]
        %v660 = vld [vmem:[%s4 + $0x48] sm:$0xff]
        %v661 = vld [vmem:[%s4 + $0x50] sm:$0xff]
        %v662 = vld [vmem:[%s4 + $0x58] sm:$0xff]
        %v663 = vld [vmem:[%s4 + $0x60] sm:$0xff]
        %v664 = vld [vmem:[%s4 + $0x68] sm:$0xff]
        %v665 = vld [vmem:[%s4 + $0x70] sm:$0xff]
        %v666 = vld [vmem:[%s4 + $0x78] sm:$0xff]
        %668 = vset.pattern.permute.xlu0 0
        %669 = vperm.xlu0 %668, %v651
        %v670 = vpop.permute.xlu0 %669
        %673 = vset.pattern.permute.xlu0 0
        %674 = vperm.xlu0 %673, %v652
        %v675 = vpop.permute.xlu0 %674
        %678 = vset.pattern.permute.xlu0 0
        %679 = vperm.xlu0 %678, %v653
        %v680 = vpop.permute.xlu0 %679
        %683 = vset.pattern.permute.xlu0 0
        %684 = vperm.xlu0 %683, %v654
        %v685 = vpop.permute.xlu0 %684
        %688 = vset.pattern.permute.xlu0 0
        %689 = vperm.xlu0 %688, %v655
        %v690 = vpop.permute.xlu0 %689
        %693 = vset.pattern.permute.xlu0 0
        %694 = vperm.xlu0 %693, %v656
        %v695 = vpop.permute.xlu0 %694
        %698 = vset.pattern.permute.xlu0 0
        %699 = vperm.xlu0 %698, %v657
        %v700 = vpop.permute.xlu0 %699
        %703 = vset.pattern.permute.xlu0 0
        %704 = vperm.xlu0 %703, %v658
        %v705 = vpop.permute.xlu0 %704
        %708 = vset.pattern.permute.xlu0 0
        %709 = vperm.xlu0 %708, %v659
        %v710 = vpop.permute.xlu0 %709
        %713 = vset.pattern.permute.xlu0 0
        %714 = vperm.xlu0 %713, %v660
        %v715 = vpop.permute.xlu0 %714
        %718 = vset.pattern.permute.xlu0 0
        %719 = vperm.xlu0 %718, %v661
        %v720 = vpop.permute.xlu0 %719
        %723 = vset.pattern.permute.xlu0 0
        %724 = vperm.xlu0 %723, %v662
        %v725 = vpop.permute.xlu0 %724
        %728 = vset.pattern.permute.xlu0 0
        %729 = vperm.xlu0 %728, %v663
        %v730 = vpop.permute.xlu0 %729
        %733 = vset.pattern.permute.xlu0 0
        %734 = vperm.xlu0 %733, %v664
        %v735 = vpop.permute.xlu0 %734
        %738 = vset.pattern.permute.xlu0 0
        %739 = vperm.xlu0 %738, %v665
        %v740 = vpop.permute.xlu0 %739
        %743 = vset.pattern.permute.xlu0 0
        %744 = vperm.xlu0 %743, %v666
        %v745 = vpop.permute.xlu0 %744
        %v763 = vunpack.c.l.b16 %v619
        %v764 = vunpack.c.l.b16 %v620
        %v765 = vunpack.c.l.b16 %v621
        %v766 = vunpack.c.l.b16 %v622
        %v767 = vunpack.c.l.b16 %v623
        %v768 = vunpack.c.l.b16 %v624
        %v769 = vunpack.c.l.b16 %v625
        %v770 = vunpack.c.l.b16 %v626
        %v771 = vunpack.c.l.b16 %v627
        %v772 = vunpack.c.l.b16 %v628
        %v773 = vunpack.c.l.b16 %v629
        %v774 = vunpack.c.l.b16 %v630
        %v775 = vunpack.c.l.b16 %v631
        %v776 = vunpack.c.l.b16 %v632
        %v777 = vunpack.c.l.b16 %v633
        %v778 = vunpack.c.l.b16 %v634
        %v779 = vpack.c.b16 %v764, %v763
        %v780 = vpack.c.b16 %v766, %v765
        %v781 = vpack.c.b16 %v768, %v767
        %v782 = vpack.c.b16 %v770, %v769
        %v783 = vpack.c.b16 %v772, %v771
        %v784 = vpack.c.b16 %v774, %v773
        %v785 = vpack.c.b16 %v776, %v775
        %v786 = vpack.c.b16 %v778, %v777
        %795 = vmatprep.subr.bf16.mxu0 0
        %796 = vmatpush1.bf16.xpose.msra.mxu0 %v635
        %797 = vmatprep.subr.bf16.mxu0 0
        %798 = vmatpush1.bf16.xpose.msra.mxu0 %v636
        %799 = vmatprep.subr.bf16.mxu0 0
        %800 = vmatpush1.bf16.xpose.msra.mxu0 %v637
        %801 = vmatprep.subr.bf16.mxu0 0
        %802 = vmatpush1.bf16.xpose.msra.mxu0 %v638
        %803 = vmatprep.subr.bf16.mxu0 0
        %804 = vmatpush1.bf16.xpose.msra.mxu0 %v639
        %805 = vmatprep.subr.bf16.mxu0 0
        %806 = vmatpush1.bf16.xpose.msra.mxu0 %v640
        %807 = vmatprep.subr.bf16.mxu0 0
        %808 = vmatpush1.bf16.xpose.msra.mxu0 %v641
        %809 = vmatprep.subr.bf16.mxu0 0
        %810 = vmatpush1.bf16.xpose.msra.mxu0 %v642
        %811 = vmatprep.subr.bf16.mxu0 0
        %812 = vmatpush1.bf16.xpose.msra.mxu0 %v643
        %813 = vmatprep.subr.bf16.mxu0 0
        %814 = vmatpush1.bf16.xpose.msra.mxu0 %v644
        %815 = vmatprep.subr.bf16.mxu0 0
        %816 = vmatpush1.bf16.xpose.msra.mxu0 %v645
        %817 = vmatprep.subr.bf16.mxu0 0
        %818 = vmatpush1.bf16.xpose.msra.mxu0 %v646
        %819 = vmatprep.subr.bf16.mxu0 0
        %820 = vmatpush1.bf16.xpose.msra.mxu0 %v647
        %821 = vmatprep.subr.bf16.mxu0 0
        %822 = vmatpush1.bf16.xpose.msra.mxu0 %v648
        %823 = vmatprep.subr.bf16.mxu0 0
        %824 = vmatpush1.bf16.xpose.msra.mxu0 %v649
        %825 = vmatprep.subr.bf16.mxu0 0
        %826 = vmatpush1.bf16.xpose.msra.mxu0 %v650
        %827 = vmatprep.mubr.bf16.mxu0 0
        %828 = vmatmul.mubr.bf16.gmra.mrb[0].mxu0 %v779
        %v829 = vpop.f32.mrb[0].mxu0
        %v830 = vadd.f32 %v670, %v829
        %v831 = vpop.f32.mrb[0].mxu0
        %v832 = vadd.f32 %v670, %v831
        %v833 = vpop.f32.mrb[0].mxu0
        %v834 = vadd.f32 %v675, %v833
        %v835 = vpop.f32.mrb[0].mxu0
        %v836 = vadd.f32 %v675, %v835
        %837 = vmatprep.mubr.bf16.mxu0 0
        %838 = vmatmul.mubr.bf16.gmra.mrb[0].mxu0 %v780
        %v839 = vpop.f32.mrb[0].mxu0
        %v840 = vadd.f32 %v680, %v839
        %v841 = vpop.f32.mrb[0].mxu0
        %v842 = vadd.f32 %v680, %v841
        %v843 = vpop.f32.mrb[0].mxu0
        %v844 = vadd.f32 %v685, %v843
        %v845 = vpop.f32.mrb[0].mxu0
        %v846 = vadd.f32 %v685, %v845
        %847 = vmatprep.mubr.bf16.mxu0 0
        %848 = vmatmul.mubr.bf16.gmra.mrb[0].mxu0 %v781
        %v849 = vpop.f32.mrb[0].mxu0
        %v850 = vadd.f32 %v690, %v849
        %v851 = vpop.f32.mrb[0].mxu0
        %v852 = vadd.f32 %v690, %v851
        %v853 = vpop.f32.mrb[0].mxu0
        %v854 = vadd.f32 %v695, %v853
        %v855 = vpop.f32.mrb[0].mxu0
        %v856 = vadd.f32 %v695, %v855
        %857 = vmatprep.mubr.bf16.mxu0 0
        %858 = vmatmul.mubr.bf16.gmra.mrb[0].mxu0 %v782
        %v859 = vpop.f32.mrb[0].mxu0
        %v860 = vadd.f32 %v700, %v859
        %v861 = vpop.f32.mrb[0].mxu0
        %v862 = vadd.f32 %v700, %v861
        %v863 = vpop.f32.mrb[0].mxu0
        %v864 = vadd.f32 %v705, %v863
        %v865 = vpop.f32.mrb[0].mxu0
        %v866 = vadd.f32 %v705, %v865
        %867 = vmatprep.mubr.bf16.mxu0 0
        %868 = vmatmul.mubr.bf16.gmra.mrb[0].mxu0 %v783
        %v869 = vpop.f32.mrb[0].mxu0
        %v870 = vadd.f32 %v710, %v869
        %v871 = vpop.f32.mrb[0].mxu0
        %v872 = vadd.f32 %v710, %v871
        %v873 = vpop.f32.mrb[0].mxu0
        %v874 = vadd.f32 %v715, %v873
        %v875 = vpop.f32.mrb[0].mxu0
        %v876 = vadd.f32 %v715, %v875
        %877 = vmatprep.mubr.bf16.mxu0 0
        %878 = vmatmul.mubr.bf16.gmra.mrb[0].mxu0 %v784
        %v879 = vpop.f32.mrb[0].mxu0
        %v880 = vadd.f32 %v720, %v879
        %v881 = vpop.f32.mrb[0].mxu0
        %v882 = vadd.f32 %v720, %v881
        %v883 = vpop.f32.mrb[0].mxu0
        %v884 = vadd.f32 %v725, %v883
        %v885 = vpop.f32.mrb[0].mxu0
        %v886 = vadd.f32 %v725, %v885
        %887 = vmatprep.mubr.bf16.mxu0 0
        %888 = vmatmul.mubr.bf16.gmra.mrb[0].mxu0 %v785
        %v889 = vpop.f32.mrb[0].mxu0
        %v890 = vadd.f32 %v730, %v889
        %v891 = vpop.f32.mrb[0].mxu0
        %v892 = vadd.f32 %v730, %v891
        %v893 = vpop.f32.mrb[0].mxu0
        %v894 = vadd.f32 %v735, %v893
        %v895 = vpop.f32.mrb[0].mxu0
        %v896 = vadd.f32 %v735, %v895
        %897 = vmatprep.mubr.bf16.mxu0 0
        %898 = vmatmul.mubr.bf16.gmra.mrb[0].mxu0 %v786
        %v899 = vpop.f32.mrb[0].mxu0
        %v900 = vadd.f32 %v740, %v899
        %v901 = vpop.f32.mrb[0].mxu0
        %v902 = vadd.f32 %v740, %v901
        %v903 = vpop.f32.mrb[0].mxu0
        %v904 = vadd.f32 %v745, %v903
        %v905 = vpop.f32.mrb[0].mxu0
        %v906 = vadd.f32 %v745, %v905
        %907 = vdwg.mxu0
        %v908 = vmax.f32 %v830, 0.0
        %v909 = vmax.f32 %v832, 0.0
        %v910 = vmax.f32 %v834, 0.0
        %v911 = vmax.f32 %v836, 0.0
        %v912 = vmax.f32 %v840, 0.0
        %v913 = vmax.f32 %v842, 0.0
        %v914 = vmax.f32 %v844, 0.0
        %v915 = vmax.f32 %v846, 0.0
        %v916 = vmax.f32 %v850, 0.0
        %v917 = vmax.f32 %v852, 0.0
        %v918 = vmax.f32 %v854, 0.0
        %v919 = vmax.f32 %v856, 0.0
        %v920 = vmax.f32 %v860, 0.0
        %v921 = vmax.f32 %v862, 0.0
        %v922 = vmax.f32 %v864, 0.0
        %v923 = vmax.f32 %v866, 0.0
        %v924 = vmax.f32 %v870, 0.0
        %v925 = vmax.f32 %v872, 0.0
        %v926 = vmax.f32 %v874, 0.0
        %v927 = vmax.f32 %v876, 0.0
        %v928 = vmax.f32 %v880, 0.0
        %v929 = vmax.f32 %v882, 0.0
        %v930 = vmax.f32 %v884, 0.0
        %v931 = vmax.f32 %v886, 0.0
        %v932 = vmax.f32 %v890, 0.0
        %v933 = vmax.f32 %v892, 0.0
        %v934 = vmax.f32 %v894, 0.0
        %v935 = vmax.f32 %v896, 0.0
        %v936 = vmax.f32 %v900, 0.0
        %v937 = vmax.f32 %v902, 0.0
        %v938 = vmax.f32 %v904, 0.0
        %v939 = vmax.f32 %v906, 0.0
        %v940 = vld [vmem:[%s5] sm:$0xff]
        %v941 = vld [vmem:[%s5 + $0x8] sm:$0xff]
        %v942 = vld [vmem:[%s5 + $0x10] sm:$0xff]
        %v943 = vld [vmem:[%s5 + $0x18] sm:$0xff]
        %v944 = vld [vmem:[%s5 + $0x20] sm:$0xff]
        %v945 = vld [vmem:[%s5 + $0x28] sm:$0xff]
        %v946 = vld [vmem:[%s5 + $0x30] sm:$0xff]
        %v947 = vld [vmem:[%s5 + $0x38] sm:$0xff]
        %v948 = vld [vmem:[%s5 + $0x40] sm:$0xff]
        %v949 = vld [vmem:[%s5 + $0x48] sm:$0xff]
        %v950 = vld [vmem:[%s5 + $0x50] sm:$0xff]
        %v951 = vld [vmem:[%s5 + $0x58] sm:$0xff]
        %v952 = vld [vmem:[%s5 + $0x60] sm:$0xff]
        %v953 = vld [vmem:[%s5 + $0x68] sm:$0xff]
        %v954 = vld [vmem:[%s5 + $0x70] sm:$0xff]
        %v955 = vld [vmem:[%s5 + $0x78] sm:$0xff]
        %957 = vset.pattern.permute.xlu0 0
        %958 = vperm.xlu0 %957, %v940
        %v959 = vpop.permute.xlu0 %958
        %962 = vset.pattern.permute.xlu0 0
        %963 = vperm.xlu0 %962, %v941
        %v964 = vpop.permute.xlu0 %963
        %967 = vset.pattern.permute.xlu0 0
        %968 = vperm.xlu0 %967, %v942
        %v969 = vpop.permute.xlu0 %968
        %972 = vset.pattern.permute.xlu0 0
        %973 = vperm.xlu0 %972, %v943
        %v974 = vpop.permute.xlu0 %973
        %977 = vset.pattern.permute.xlu0 0
        %978 = vperm.xlu0 %977, %v944
        %v979 = vpop.permute.xlu0 %978
        %982 = vset.pattern.permute.xlu0 0
        %983 = vperm.xlu0 %982, %v945
        %v984 = vpop.permute.xlu0 %983
        %987 = vset.pattern.permute.xlu0 0
        %988 = vperm.xlu0 %987, %v946
        %v989 = vpop.permute.xlu0 %988
        %992 = vset.pattern.permute.xlu0 0
        %993 = vperm.xlu0 %992, %v947
        %v994 = vpop.permute.xlu0 %993
        %997 = vset.pattern.permute.xlu0 0
        %998 = vperm.xlu0 %997, %v948
        %v999 = vpop.permute.xlu0 %998
        %1002 = vset.pattern.permute.xlu0 0
        %1003 = vperm.xlu0 %1002, %v949
        %v1004 = vpop.permute.xlu0 %1003
        %1007 = vset.pattern.permute.xlu0 0
        %1008 = vperm.xlu0 %1007, %v950
        %v1009 = vpop.permute.xlu0 %1008
        %1012 = vset.pattern.permute.xlu0 0
        %1013 = vperm.xlu0 %1012, %v951
        %v1014 = vpop.permute.xlu0 %1013
        %1017 = vset.pattern.permute.xlu0 0
        %1018 = vperm.xlu0 %1017, %v952
        %v1019 = vpop.permute.xlu0 %1018
        %1022 = vset.pattern.permute.xlu0 0
        %1023 = vperm.xlu0 %1022, %v953
        %v1024 = vpop.permute.xlu0 %1023
        %1027 = vset.pattern.permute.xlu0 0
        %1028 = vperm.xlu0 %1027, %v954
        %v1029 = vpop.permute.xlu0 %1028
        %1032 = vset.pattern.permute.xlu0 0
        %1033 = vperm.xlu0 %1032, %v955
        %v1034 = vpop.permute.xlu0 %1033
        %v1036 = vmul.f32 %v908, %v959
        %v1037 = vmul.f32 %v909, %v959
        %v1038 = vmul.f32 %v910, %v964
        %v1039 = vmul.f32 %v911, %v964
        %v1040 = vmul.f32 %v912, %v969
        %v1041 = vmul.f32 %v913, %v969
        %v1042 = vmul.f32 %v914, %v974
        %v1043 = vmul.f32 %v915, %v974
        %v1044 = vmul.f32 %v916, %v979
        %v1045 = vmul.f32 %v917, %v979
        %v1046 = vmul.f32 %v918, %v984
        %v1047 = vmul.f32 %v919, %v984
        %v1048 = vmul.f32 %v920, %v989
        %v1049 = vmul.f32 %v921, %v989
        %v1050 = vmul.f32 %v922, %v994
        %v1051 = vmul.f32 %v923, %v994
        %v1052 = vmul.f32 %v924, %v999
        %v1053 = vmul.f32 %v925, %v999
        %v1054 = vmul.f32 %v926, %v1004
        %v1055 = vmul.f32 %v927, %v1004
        %v1056 = vmul.f32 %v928, %v1009
        %v1057 = vmul.f32 %v929, %v1009
        %v1058 = vmul.f32 %v930, %v1014
        %v1059 = vmul.f32 %v931, %v1014
        %v1060 = vmul.f32 %v932, %v1019
        %v1061 = vmul.f32 %v933, %v1019
        %v1062 = vmul.f32 %v934, %v1024
        %v1063 = vmul.f32 %v935, %v1024
        %v1064 = vmul.f32 %v936, %v1029
        %v1065 = vmul.f32 %v937, %v1029
        %v1066 = vmul.f32 %v938, %v1034
        %v1067 = vmul.f32 %v939, %v1034
        %v1068 = vadd.f32 %v1036, %v1038
        %v1069 = vadd.f32 %v1068, %v1040
        %v1070 = vadd.f32 %v1069, %v1042
        %v1071 = vadd.f32 %v1070, %v1044
        %v1072 = vadd.f32 %v1071, %v1046
        %v1073 = vadd.f32 %v1072, %v1048
        %v1074 = vadd.f32 %v1073, %v1050
        %v1075 = vadd.f32 %v1074, %v1052
        %v1076 = vadd.f32 %v1075, %v1054
        %v1077 = vadd.f32 %v1076, %v1056
        %v1078 = vadd.f32 %v1077, %v1058
        %v1079 = vadd.f32 %v1078, %v1060
        %v1080 = vadd.f32 %v1079, %v1062
        %v1081 = vadd.f32 %v1080, %v1064
        %v1082 = vadd.f32 %v1081, %v1066
        %v1083 = vrot.slane %v1082, 4
        %v1084 = vadd.f32 %v1082, %v1083
        %v1085 = vrot.slane %v1084, 2
        %v1086 = vadd.f32 %v1084, %v1085
        %v1087 = vrot.slane %v1086, 1
        %v1088 = vadd.f32 %v1086, %v1087
        %v1089 = vadd.f32 %v1037, %v1039
        %v1090 = vadd.f32 %v1089, %v1041
        %v1091 = vadd.f32 %v1090, %v1043
        %v1092 = vadd.f32 %v1091, %v1045
        %v1093 = vadd.f32 %v1092, %v1047
        %v1094 = vadd.f32 %v1093, %v1049
        %v1095 = vadd.f32 %v1094, %v1051
        %v1096 = vadd.f32 %v1095, %v1053
        %v1097 = vadd.f32 %v1096, %v1055
        %v1098 = vadd.f32 %v1097, %v1057
        %v1099 = vadd.f32 %v1098, %v1059
        %v1100 = vadd.f32 %v1099, %v1061
        %v1101 = vadd.f32 %v1100, %v1063
        %v1102 = vadd.f32 %v1101, %v1065
        %v1103 = vadd.f32 %v1102, %v1067
        %v1104 = vrot.slane %v1103, 4
        %v1105 = vadd.f32 %v1103, %v1104
        %v1106 = vrot.slane %v1105, 2
        %v1107 = vadd.f32 %v1105, %v1106
        %v1108 = vrot.slane %v1107, 1
        %v1109 = vadd.f32 %v1107, %v1108
        %s1110 = sld [smem:[#allocation2]]
        %v1111 = vstv %s1110
        %v1112 = vadd.f32 %v1088, %v1111
        %v1113 = vadd.f32 %v1109, %v1111
        %v1116 = vcombine.low %v1112, %v1113
        %v1118 = vunpack.c.l.s4 1966171168
        %v1119 = vunpack.c.0.s8 %v1118
        %v1120 = vlaneseq
        %v1121 = vshrl.u32 %v1120, 7
        %v1122 = vsub.s32 %v1119, %v1121
        %v1123 = vrot.slane %v1116, %v1122
        %v1125 = vunpack.c.l.s4 1966171168
        %v1126 = vunpack.c.0.s8 %v1125
        %v1127 = vlaneseq
        %v1128 = vshrl.u32 %v1127, 7
        %v1129 = vsub.s32 %v1126, %v1128
        %v1130 = vrot.slane %v1123, %v1129
        %v1132 = vlaneseq
        %vm1133 = vcmp.ge.s32.totalorder %v1132, 0
        %vm1134 = vcmp.lt.s32.totalorder %v1132, 256
        %vm1135 = vmand %vm1133, %vm1134
        %1136 = vst.msk [vmem:[%s285] sm:$0x3] %vm1135, %v1130
        %s1137 = sand.u32 %s182, 1
        %s1138 = scalar_lea.sflag [#allocation4], %s1137
        %s1139 = sand.u32 %s182, 1
        %s1140 = smul.addr %s1139, 2
        %s1141 = scalar_lea.vmem [#allocation3], %s1140
        // Predicated region
        $region49: #{tpu_custom_call.1} parent=47 // pred_check
          %p1142 = pneg %p192
        $region50: #{tpu_custom_call.1} parent=47 // pred_check_branch
          %1144 = sbr.rel (%p1142) target = $region52
        $region51: #{tpu_custom_call.1} parent=47 // pred_region
          %s1145 = smul.u32 2, %s22
          %s1146 = ssub.s32 3, %s1145
          %p1147 = scmp.lt.s32.totalorder %s1146, 2
          %s1148 = scalar_select %p1147, %s1146, 2
          %s1149 = smul.u32 16, %s1148
          %s1151 = ssub.s32 32, %s1149
          %1152 = vsyncadd %s1138, %s1151
          %p1153 = scmp.ne.s32.totalorder 0, %s1149
          %s1154 = smul.addr %s1145, 16
          %s1155 = scalar_lea.hbm %s7, %s1154
          %s1156 = sshll.u32 %s1148, 4
          %s1157 = sshll.u32 %s1141, 4
          %s1158 = int_to_ptr.vmem [resolvable:$true] %s1157
          %1160 = dma.vmem_to_hbm [thread:$0]  (%p1153), %s1158, %s1156, %s1155, %s1138
        $region52: #{tpu_custom_call.1} parent=47 // pred_fallthru
          _
      $region48: #{tpu_custom_call.1} parent=5 // pred_fallthru
        _
      %p1161 = scmp.le.s32.totalorder 2, %s17
      // Predicated region
      $region53: #{tpu_custom_call.1} parent=5 // pred_check
        %p1162 = pneg %p1161
      $region54: #{tpu_custom_call.1} parent=5 // pred_check_branch
        %1164 = sbr.rel (%p1162) target = $region56
      $region55: #{tpu_custom_call.1} parent=5 // pred_region
        %s1165 = ssub.s32 %s17, 2
        // Predicated region
        $region57: #{tpu_custom_call.1} parent=55 // pred_check
          %p1166 = pneg %p198
        $region58: #{tpu_custom_call.1} parent=55 // pred_check_branch
          %1168 = sbr.rel (%p1166) target = $region60
        $region59: #{tpu_custom_call.1} parent=55 // pred_region
          %s1169 = sand.u32 %s183, 1
          %s1170 = scalar_lea.sflag [#allocation4], %s1169
          %s1171 = sand.u32 %s183, 1
          %s1172 = smul.addr %s1171, 2
          %s1173 = scalar_lea.vmem [#allocation3], %s1172
          %1174 = dma.done %s1170, 32
        $region60: #{tpu_custom_call.1} parent=55 // pred_fallthru
          _
      $region56: #{tpu_custom_call.1} parent=5 // pred_fallthru
        _
    $region6: #{tpu_custom_call.1} parent=1 // loop_footer
      %s21 = sadd.s32 1, %s17
    $region7: #{tpu_custom_call.1} parent=1 // loop_footer_branch
      %16 = sbr.rel target = $region3
    $region8: #{tpu_custom_call.1} parent=1 // loop_exit
      _
    %1175 = vsyncpa [#allocation4], 1
    %s1176 = scalar_lea.sflag [#allocation4], 1
    %1177 = vsyncpa %s1176, 1

</llo_original>
